<compile_context>
chip_gen: v7x
topology: tpu7x:2x2x1
jax: 0.10.0
libtpu: 0.0.40
codegen_flags: <defaults>
</compile_context>

<pallas_src>
import jax
import jax.numpy as jnp
from jax.experimental import pallas as pl
from jax.experimental.pallas import tpu as pltpu


def _add_relu_kernel(a_ref, b_ref, o_ref):
    o_ref[...] = jnp.maximum(a_ref[...] + b_ref[...], 0.0)


def _num_tensorcores() -> int:
    """Best-effort TensorCores-per-chip: 2 on v7x (and v4/v5p megacore), else 1."""
    try:
        kind = (getattr(jax.devices()[0], "device_kind", "") or "").lower()
    except Exception:
        return 1
    if "v7" in kind or "v4" in kind or "v5p" in kind:
        return 2
    return 1


def _sublane(elem_bytes: int) -> int:
    # Preferred minimum sublane tile: 8 for 32-bit, 16 for 16-bit, 32 for 8-bit.
    return 8 * max(1, 4 // max(elem_bytes, 1))


def _pick_lane_dense_layout(total, elem_bytes, num_cores,
                            max_block_bytes=2 << 20, max_cols=1 << 16):
    """Factor `total` into (rows, cols) with cols a multiple of 128 (lane-dense,
    unmasked full-width stores) and rows splitting into `grid` equal,
    sublane-aligned blocks of <= max_block_bytes each.
    Preference: feed every TensorCore (grid == num_cores) first, then widest
    cols.  Returns (rows, cols, grid) or None."""
    sub = _sublane(elem_bytes)
    best = None  # (key, (rows, cols, grid))
    cols = 128
    limit = min(total, max_cols)
    while cols <= limit:
        if total % cols == 0:
            rows = total // cols
            for g in sorted({num_cores, 1}, reverse=True):
                if rows % (sub * g) == 0 and \
                        (rows // g) * cols * elem_bytes <= max_block_bytes:
                    key = (g == num_cores, cols)
                    if best is None or key > best[0]:
                        best = (key, (rows, cols, g))
                    break
        cols += 128
    return None if best is None else best[1]


def _call_lane_dense(a2d, b2d, rows, cols, grid_n, elem_bytes):
    block_rows = rows // grid_n
    total = rows * cols
    cost = pl.CostEstimate(flops=2 * total, transcendentals=0,
                           bytes_accessed=3 * total * elem_bytes)
    return pl.pallas_call(
        _add_relu_kernel,
        out_shape=jax.ShapeDtypeStruct((rows, cols), a2d.dtype),
        grid=(grid_n,),
        in_specs=[
            pl.BlockSpec((block_rows, cols), lambda i: (i, 0)),
            pl.BlockSpec((block_rows, cols), lambda i: (i, 0)),
        ],
        out_specs=pl.BlockSpec((block_rows, cols), lambda i: (i, 0)),
        compiler_params=pltpu.CompilerParams(
            dimension_semantics=("parallel",)
        ),
        cost_estimate=cost,
    )(a2d, b2d)


def add_relu(x98: jax.Array, x90: jax.Array) -> jax.Array:
    assert x98.shape == x90.shape and x98.dtype == x90.dtype
    orig_shape = x98.shape
    total = x98.size
    elem_bytes = x98.dtype.itemsize
    num_cores = _num_tensorcores()

    # Fast path: exact lane-dense factorization of the element count.
    layout = _pick_lane_dense_layout(total, elem_bytes, num_cores)
    if layout is not None:
        rows, cols, grid_n = layout
        out2d = _call_lane_dense(
            x98.reshape(rows, cols), x90.reshape(rows, cols),
            rows, cols, grid_n, elem_bytes)
        return out2d.reshape(orig_shape)

    # Fallback: pad the flattened arrays to a (sublane x 128)-multiple so every
    # store is a full-width unmasked vst, run the same kernel on a (rows, 128)
    # slab, then slice the padding off.  Pad/slice are cheap fusable XLA ops.
    sub = _sublane(elem_bytes)
    quantum = sub * 128
    padded = ((total + quantum - 1) // quantum) * quantum
    flat_a = x98.reshape(-1)
    flat_b = x90.reshape(-1)
    if padded != total:
        flat_a = jnp.pad(flat_a, (0, padded - total))
        flat_b = jnp.pad(flat_b, (0, padded - total))
    cols = 128
    rows = padded // cols
    # Cap block rows so the double-buffered 3-array pipeline stays well under
    # every generation's scoped-VMEM default.
    max_tile_rows = max(sub, ((2 << 20) // (cols * elem_bytes)) // sub * sub)
    tile_rows = rows if rows <= max_tile_rows else max_tile_rows
    grid_n = pl.cdiv(rows, tile_rows)
    cost = pl.CostEstimate(flops=2 * padded, transcendentals=0,
                           bytes_accessed=3 * padded * elem_bytes)
    out2d = pl.pallas_call(
        _add_relu_kernel,
        out_shape=jax.ShapeDtypeStruct((rows, cols), x98.dtype),
        grid=(grid_n,),
        in_specs=[
            pl.BlockSpec((tile_rows, cols), lambda i: (i, 0)),
            pl.BlockSpec((tile_rows, cols), lambda i: (i, 0)),
        ],
        out_specs=pl.BlockSpec((tile_rows, cols), lambda i: (i, 0)),
        compiler_params=pltpu.CompilerParams(
            dimension_semantics=("parallel",)
        ),
        cost_estimate=cost,
    )(flat_a.reshape(rows, cols), flat_b.reshape(rows, cols))
    return out2d.reshape(-1)[:total].reshape(orig_shape)


if __name__ == "__main__":
    key = jax.random.PRNGKey(0)
    k1, k2, k3, k4 = jax.random.split(key, 4)

    # Shapes from the module: x98, x90 are both (1, 1024, 14, 14) float32.
    x98 = jax.random.normal(k1, (1, 1024, 14, 14), dtype=jnp.float32)
    x90 = jax.random.normal(k2, (1, 1024, 14, 14), dtype=jnp.float32)

    out = add_relu(x98, x90)
    jax.block_until_ready(out)

    ref = jnp.maximum(x98 + x90, 0.0)
    assert out.shape == ref.shape
    assert jnp.allclose(out, ref), "mismatch vs reference (lane-dense path)"

    # Exercise the padded fallback path with a shape that does not factor into
    # a lane-dense slab.
    a_small = jax.random.normal(k3, (1, 3, 14, 14), dtype=jnp.float32)
    b_small = jax.random.normal(k4, (1, 3, 14, 14), dtype=jnp.float32)
    out_small = add_relu(a_small, b_small)
    jax.block_until_ready(out_small)
    ref_small = jnp.maximum(a_small + b_small, 0.0)
    assert jnp.allclose(out_small, ref_small), "mismatch vs reference (fallback path)"

    print("KERNEL_OK")
</pallas_src>

<mosaic_0001>
module attributes {stable_mosaic.version = 11 : i64} {
  func.func @_add_relu_kernel(%arg0: i32, %arg1: memref<8x25088xf32, #tpu.memory_space<vmem>>, %arg2: memref<8x25088xf32, #tpu.memory_space<vmem>>, %arg3: memref<8x25088xf32, #tpu.memory_space<vmem>>) attributes {dimension_semantics = [#tpu.dimension_semantics<parallel>], iteration_bounds = array<i64: 1>, scalar_prefetch = 0 : i64, scratch_operands = 0 : i64, tpu.core_type = #tpu.core_type<tc>, window_params = [{transform_indices = @transform_0, window_bounds = array<i64: 8, 25088>}, {transform_indices = @transform_1, window_bounds = array<i64: 8, 25088>}, {transform_indices = @transform_2, window_bounds = array<i64: 8, 25088>}]} {
    %c0 = arith.constant 0 : index
    %c0_0 = arith.constant 0 : index
    %0 = vector.load %arg1[%c0, %c0_0] : memref<8x25088xf32, #tpu.memory_space<vmem>>, vector<8x25088xf32>
    %c0_1 = arith.constant 0 : index
    %c0_2 = arith.constant 0 : index
    %1 = vector.load %arg2[%c0_1, %c0_2] : memref<8x25088xf32, #tpu.memory_space<vmem>>, vector<8x25088xf32>
    %2 = arith.addf %0, %1 : vector<8x25088xf32>
    %cst = arith.constant 0.000000e+00 : f32
    %3 = vector.broadcast %cst : f32 to vector<8x25088xf32>
    %4 = arith.maximumf %2, %3 : vector<8x25088xf32>
    %c0_3 = arith.constant 0 : index
    %c0_4 = arith.constant 0 : index
    %5 = vector.load %arg3[%c0_3, %c0_4] : memref<8x25088xf32, #tpu.memory_space<vmem>>, vector<8x25088xf32>
    tpu.vector_store %arg3[%c0_3, %c0_4], %4 {strides = array<i32>} : memref<8x25088xf32, #tpu.memory_space<vmem>>, vector<8x25088xf32>,
    return
  }
  func.func @transform_0(%arg0: i32) -> (i32, i32) {
    %c0_i32 = arith.constant 0 : i32
    %c0_i32_0 = arith.constant 0 : i32
    return %arg0, %c0_i32 : i32, i32
  }
  func.func @transform_1(%arg0: i32) -> (i32, i32) {
    %c0_i32 = arith.constant 0 : i32
    %c0_i32_0 = arith.constant 0 : i32
    return %arg0, %c0_i32 : i32, i32
  }
  func.func @transform_2(%arg0: i32) -> (i32, i32) {
    %c0_i32 = arith.constant 0 : i32
    %c0_i32_0 = arith.constant 0 : i32
    return %arg0, %c0_i32 : i32, i32
  }
}

</mosaic_0001>

<llo_original>
// kernel: tpu_custom_call.1
$region0: #{tpu_custom_call.1}
  #allocation0 [shape = 'u32[]', space=smem, size = 0x4, offset = 0x4, fixed_abs, tag = 'smem constant byte address 0x4 - core index']
  #allocation1 [shape = 'u32[144,128]{1,0:T(1,128)}', space=vmem, size = 0x12000, scoped, tag = 'internal scratch']
  %s0 = inlined_call_operand.hbm [shape: f32[8,25088], index: 0, kind: input, shape index: {}]
  %s1 = inlined_call_operand.hbm [shape: f32[8,25088], index: 1, kind: input, shape index: {}]
  %s2 = inlined_call_operand.hbm [shape: f32[8,25088], index: 2, kind: output, shape index: {}]
  %s3 = sld [smem:[#allocation0]]
  $region26: #{tpu_custom_call.1} parent=0
    _
  %s5 = ssub.s32 1, %s3
  %s6 = scalar_select 0, %s5, %s3
  $region1: #{tpu_custom_call.1} parent=0
    #allocation2 [shape = 'u8[802816]{0}', space=vmem, size = 0xc4000, scoped, tag = 'input window, operand 0, single buffered']
    #allocation3 [shape = 's32[1]{0}', space=sflag, size = 0x4, scoped, tag = 'scoped memory for tpu_custom_call.1']
    #allocation4 [shape = 's32[1]{0}', space=sflag, size = 0x4, scoped, tag = 'scoped memory for tpu_custom_call.1']
    #allocation5 [shape = 'u8[802816]{0}', space=vmem, size = 0xc4000, scoped, tag = 'input window, operand 1, single buffered']
    #allocation6 [shape = 's32[1]{0}', space=sflag, size = 0x4, scoped, tag = 'scoped memory for tpu_custom_call.1']
    #allocation7 [shape = 'u8[802816]{0}', space=vmem, size = 0xc4000, scoped, tag = 'output window, operand 0, single buffered']
    %7 = vsyncpa [#allocation3], 0
    %8 = vsyncpa [#allocation6], 0
    %9 = vsyncpa [#allocation4], 0
    // Predicated region
    $region2: #{tpu_custom_call.1} parent=1 // pred_check
      _
    $region3: #{tpu_custom_call.1} parent=1 // pred_check_branch
      %11 = sbr.rel (0) target = $region5
    $region4: #{tpu_custom_call.1} parent=1 // pred_region
      %s13 = ssub.s32 25088, 25088
      %14 = vsyncadd [#allocation3], %s13
      %s16 = sshll.u32 [#allocation2], 4
      %s17 = int_to_ptr.vmem [resolvable:$true] %s16
      %19 = dma.hbm_to_vmem [thread:$0]  %s0, 25088, %s17, [#allocation3]
    $region5: #{tpu_custom_call.1} parent=1 // pred_fallthru
      _
    // Predicated region
    $region6: #{tpu_custom_call.1} parent=1 // pred_check
      _
    $region7: #{tpu_custom_call.1} parent=1 // pred_check_branch
      %21 = sbr.rel (0) target = $region9
    $region8: #{tpu_custom_call.1} parent=1 // pred_region
      %s23 = ssub.s32 25088, 25088
      %24 = vsyncadd [#allocation6], %s23
      %s26 = sshll.u32 [#allocation5], 4
      %s27 = int_to_ptr.vmem [resolvable:$true] %s26
      %29 = dma.hbm_to_vmem [thread:$0]  %s1, 25088, %s27, [#allocation6]
    $region9: #{tpu_custom_call.1} parent=1 // pred_fallthru
      _
    // Predicated region
    $region10: #{tpu_custom_call.1} parent=1 // pred_check
      _
    $region11: #{tpu_custom_call.1} parent=1 // pred_check_branch
      %31 = sbr.rel (0) target = $region13
    $region12: #{tpu_custom_call.1} parent=1 // pred_region
      %32 = dma.done [#allocation3], 25088
    $region13: #{tpu_custom_call.1} parent=1 // pred_fallthru
      _
    // Predicated region
    $region14: #{tpu_custom_call.1} parent=1 // pred_check
      _
    $region15: #{tpu_custom_call.1} parent=1 // pred_check_branch
      %34 = sbr.rel (0) target = $region17
    $region16: #{tpu_custom_call.1} parent=1 // pred_region
      %35 = dma.done [#allocation6], 25088
    $region17: #{tpu_custom_call.1} parent=1 // pred_fallthru
      _
    %v36 = vld [vmem:[#allocation2] sm:$0xff]
    %v37 = vld [vmem:[#allocation2 + $0x8] sm:$0xff]
    %v38 = vld [vmem:[#allocation2 + $0x10] sm:$0xff]
    %v39 = vld [vmem:[#allocation2 + $0x18] sm:$0xff]
    %v40 = vld [vmem:[#allocation2 + $0x20] sm:$0xff]
    %v41 = vld [vmem:[#allocation2 + $0x28] sm:$0xff]
    %v42 = vld [vmem:[#allocation2 + $0x30] sm:$0xff]
    %v43 = vld [vmem:[#allocation2 + $0x38] sm:$0xff]
    %v44 = vld [vmem:[#allocation2 + $0x40] sm:$0xff]
    %v45 = vld [vmem:[#allocation2 + $0x48] sm:$0xff]
    %v46 = vld [vmem:[#allocation2 + $0x50] sm:$0xff]
    %v47 = vld [vmem:[#allocation2 + $0x58] sm:$0xff]
    %v48 = vld [vmem:[#allocation2 + $0x60] sm:$0xff]
    %v49 = vld [vmem:[#allocation2 + $0x68] sm:$0xff]
    %v50 = vld [vmem:[#allocation2 + $0x70] sm:$0xff]
    %v51 = vld [vmem:[#allocation2 + $0x78] sm:$0xff]
    %v52 = vld [vmem:[#allocation2 + $0x80] sm:$0xff]
    %v53 = vld [vmem:[#allocation2 + $0x88] sm:$0xff]
    %v54 = vld [vmem:[#allocation2 + $0x90] sm:$0xff]
    %v55 = vld [vmem:[#allocation2 + $0x98] sm:$0xff]
    %v56 = vld [vmem:[#allocation2 + $0xa0] sm:$0xff]
    %v57 = vld [vmem:[#allocation2 + $0xa8] sm:$0xff]
    %v58 = vld [vmem:[#allocation2 + $0xb0] sm:$0xff]
    %v59 = vld [vmem:[#allocation2 + $0xb8] sm:$0xff]
    %v60 = vld [vmem:[#allocation2 + $0xc0] sm:$0xff]
    %v61 = vld [vmem:[#allocation2 + $0xc8] sm:$0xff]
    %v62 = vld [vmem:[#allocation2 + $0xd0] sm:$0xff]
    %v63 = vld [vmem:[#allocation2 + $0xd8] sm:$0xff]
    %v64 = vld [vmem:[#allocation2 + $0xe0] sm:$0xff]
    %v65 = vld [vmem:[#allocation2 + $0xe8] sm:$0xff]
    %v66 = vld [vmem:[#allocation2 + $0xf0] sm:$0xff]
    %v67 = vld [vmem:[#allocation2 + $0xf8] sm:$0xff]
    %v68 = vld [vmem:[#allocation2 + $0x100] sm:$0xff]
    %v69 = vld [vmem:[#allocation2 + $0x108] sm:$0xff]
    %v70 = vld [vmem:[#allocation2 + $0x110] sm:$0xff]
    %v71 = vld [vmem:[#allocation2 + $0x118] sm:$0xff]
    %v72 = vld [vmem:[#allocation2 + $0x120] sm:$0xff]
    %v73 = vld [vmem:[#allocation2 + $0x128] sm:$0xff]
    %v74 = vld [vmem:[#allocation2 + $0x130] sm:$0xff]
    %v75 = vld [vmem:[#allocation2 + $0x138] sm:$0xff]
    %v76 = vld [vmem:[#allocation2 + $0x140] sm:$0xff]
    %v77 = vld [vmem:[#allocation2 + $0x148] sm:$0xff]
    %v78 = vld [vmem:[#allocation2 + $0x150] sm:$0xff]
    %v79 = vld [vmem:[#allocation2 + $0x158] sm:$0xff]
    %v80 = vld [vmem:[#allocation2 + $0x160] sm:$0xff]
    %v81 = vld [vmem:[#allocation2 + $0x168] sm:$0xff]
    %v82 = vld [vmem:[#allocation2 + $0x170] sm:$0xff]
    %v83 = vld [vmem:[#allocation2 + $0x178] sm:$0xff]
    %v84 = vld [vmem:[#allocation2 + $0x180] sm:$0xff]
    %v85 = vld [vmem:[#allocation2 + $0x188] sm:$0xff]
    %v86 = vld [vmem:[#allocation2 + $0x190] sm:$0xff]
    %v87 = vld [vmem:[#allocation2 + $0x198] sm:$0xff]
    %v88 = vld [vmem:[#allocation2 + $0x1a0] sm:$0xff]
    %v89 = vld [vmem:[#allocation2 + $0x1a8] sm:$0xff]
    %v90 = vld [vmem:[#allocation2 + $0x1b0] sm:$0xff]
    %v91 = vld [vmem:[#allocation2 + $0x1b8] sm:$0xff]
    %v92 = vld [vmem:[#allocation2 + $0x1c0] sm:$0xff]
    %v93 = vld [vmem:[#allocation2 + $0x1c8] sm:$0xff]
    %v94 = vld [vmem:[#allocation2 + $0x1d0] sm:$0xff]
    %v95 = vld [vmem:[#allocation2 + $0x1d8] sm:$0xff]
    %v96 = vld [vmem:[#allocation2 + $0x1e0] sm:$0xff]
    %v97 = vld [vmem:[#allocation2 + $0x1e8] sm:$0xff]
    %v98 = vld [vmem:[#allocation2 + $0x1f0] sm:$0xff]
    %v99 = vld [vmem:[#allocation2 + $0x1f8] sm:$0xff]
    %v100 = vld [vmem:[#allocation2 + $0x200] sm:$0xff]
    %v101 = vld [vmem:[#allocation2 + $0x208] sm:$0xff]
    %v102 = vld [vmem:[#allocation2 + $0x210] sm:$0xff]
    %v103 = vld [vmem:[#allocation2 + $0x218] sm:$0xff]
    %v104 = vld [vmem:[#allocation2 + $0x220] sm:$0xff]
    %v105 = vld [vmem:[#allocation2 + $0x228] sm:$0xff]
    %v106 = vld [vmem:[#allocation2 + $0x230] sm:$0xff]
    %v107 = vld [vmem:[#allocation2 + $0x238] sm:$0xff]
    %v108 = vld [vmem:[#allocation2 + $0x240] sm:$0xff]
    %v109 = vld [vmem:[#allocation2 + $0x248] sm:$0xff]
    %v110 = vld [vmem:[#allocation2 + $0x250] sm:$0xff]
    %v111 = vld [vmem:[#allocation2 + $0x258] sm:$0xff]
    %v112 = vld [vmem:[#allocation2 + $0x260] sm:$0xff]
    %v113 = vld [vmem:[#allocation2 + $0x268] sm:$0xff]
    %v114 = vld [vmem:[#allocation2 + $0x270] sm:$0xff]
    %v115 = vld [vmem:[#allocation2 + $0x278] sm:$0xff]
    %v116 = vld [vmem:[#allocation2 + $0x280] sm:$0xff]
    %v117 = vld [vmem:[#allocation2 + $0x288] sm:$0xff]
    %v118 = vld [vmem:[#allocation2 + $0x290] sm:$0xff]
    %v119 = vld [vmem:[#allocation2 + $0x298] sm:$0xff]
    %v120 = vld [vmem:[#allocation2 + $0x2a0] sm:$0xff]
    %v121 = vld [vmem:[#allocation2 + $0x2a8] sm:$0xff]
    %v122 = vld [vmem:[#allocation2 + $0x2b0] sm:$0xff]
    %v123 = vld [vmem:[#allocation2 + $0x2b8] sm:$0xff]
    %v124 = vld [vmem:[#allocation2 + $0x2c0] sm:$0xff]
    %v125 = vld [vmem:[#allocation2 + $0x2c8] sm:$0xff]
    %v126 = vld [vmem:[#allocation2 + $0x2d0] sm:$0xff]
    %v127 = vld [vmem:[#allocation2 + $0x2d8] sm:$0xff]
    %v128 = vld [vmem:[#allocation2 + $0x2e0] sm:$0xff]
    %v129 = vld [vmem:[#allocation2 + $0x2e8] sm:$0xff]
    %v130 = vld [vmem:[#allocation2 + $0x2f0] sm:$0xff]
    %v131 = vld [vmem:[#allocation2 + $0x2f8] sm:$0xff]
    %v132 = vld [vmem:[#allocation2 + $0x300] sm:$0xff]
    %v133 = vld [vmem:[#allocation2 + $0x308] sm:$0xff]
    %v134 = vld [vmem:[#allocation2 + $0x310] sm:$0xff]
    %v135 = vld [vmem:[#allocation2 + $0x318] sm:$0xff]
    %v136 = vld [vmem:[#allocation2 + $0x320] sm:$0xff]
    %v137 = vld [vmem:[#allocation2 + $0x328] sm:$0xff]
    %v138 = vld [vmem:[#allocation2 + $0x330] sm:$0xff]
    %v139 = vld [vmem:[#allocation2 + $0x338] sm:$0xff]
    %v140 = vld [vmem:[#allocation2 + $0x340] sm:$0xff]
    %v141 = vld [vmem:[#allocation2 + $0x348] sm:$0xff]
    %v142 = vld [vmem:[#allocation2 + $0x350] sm:$0xff]
    %v143 = vld [vmem:[#allocation2 + $0x358] sm:$0xff]
    %v144 = vld [vmem:[#allocation2 + $0x360] sm:$0xff]
    %v145 = vld [vmem:[#allocation2 + $0x368] sm:$0xff]
    %v146 = vld [vmem:[#allocation2 + $0x370] sm:$0xff]
    %v147 = vld [vmem:[#allocation2 + $0x378] sm:$0xff]
    %v148 = vld [vmem:[#allocation2 + $0x380] sm:$0xff]
    %v149 = vld [vmem:[#allocation2 + $0x388] sm:$0xff]
    %v150 = vld [vmem:[#allocation2 + $0x390] sm:$0xff]
    %v151 = vld [vmem:[#allocation2 + $0x398] sm:$0xff]
    %v152 = vld [vmem:[#allocation2 + $0x3a0] sm:$0xff]
    %v153 = vld [vmem:[#allocation2 + $0x3a8] sm:$0xff]
    %v154 = vld [vmem:[#allocation2 + $0x3b0] sm:$0xff]
    %v155 = vld [vmem:[#allocation2 + $0x3b8] sm:$0xff]
    %v156 = vld [vmem:[#allocation2 + $0x3c0] sm:$0xff]
    %v157 = vld [vmem:[#allocation2 + $0x3c8] sm:$0xff]
    %v158 = vld [vmem:[#allocation2 + $0x3d0] sm:$0xff]
    %v159 = vld [vmem:[#allocation2 + $0x3d8] sm:$0xff]
    %v160 = vld [vmem:[#allocation2 + $0x3e0] sm:$0xff]
    %v161 = vld [vmem:[#allocation2 + $0x3e8] sm:$0xff]
    %v162 = vld [vmem:[#allocation2 + $0x3f0] sm:$0xff]
    %v163 = vld [vmem:[#allocation2 + $0x3f8] sm:$0xff]
    %v164 = vld [vmem:[#allocation2 + $0x400] sm:$0xff]
    %v165 = vld [vmem:[#allocation2 + $0x408] sm:$0xff]
    %v166 = vld [vmem:[#allocation2 + $0x410] sm:$0xff]
    %v167 = vld [vmem:[#allocation2 + $0x418] sm:$0xff]
    %v168 = vld [vmem:[#allocation2 + $0x420] sm:$0xff]
    %v169 = vld [vmem:[#allocation2 + $0x428] sm:$0xff]
    %v170 = vld [vmem:[#allocation2 + $0x430] sm:$0xff]
    %v171 = vld [vmem:[#allocation2 + $0x438] sm:$0xff]
    %v172 = vld [vmem:[#allocation2 + $0x440] sm:$0xff]
    %v173 = vld [vmem:[#allocation2 + $0x448] sm:$0xff]
    %v174 = vld [vmem:[#allocation2 + $0x450] sm:$0xff]
    %v175 = vld [vmem:[#allocation2 + $0x458] sm:$0xff]
    %v176 = vld [vmem:[#allocation2 + $0x460] sm:$0xff]
    %v177 = vld [vmem:[#allocation2 + $0x468] sm:$0xff]
    %v178 = vld [vmem:[#allocation2 + $0x470] sm:$0xff]
    %v179 = vld [vmem:[#allocation2 + $0x478] sm:$0xff]
    %v180 = vld [vmem:[#allocation2 + $0x480] sm:$0xff]
    %v181 = vld [vmem:[#allocation2 + $0x488] sm:$0xff]
    %v182 = vld [vmem:[#allocation2 + $0x490] sm:$0xff]
    %v183 = vld [vmem:[#allocation2 + $0x498] sm:$0xff]
    %v184 = vld [vmem:[#allocation2 + $0x4a0] sm:$0xff]
    %v185 = vld [vmem:[#allocation2 + $0x4a8] sm:$0xff]
    %v186 = vld [vmem:[#allocation2 + $0x4b0] sm:$0xff]
    %v187 = vld [vmem:[#allocation2 + $0x4b8] sm:$0xff]
    %v188 = vld [vmem:[#allocation2 + $0x4c0] sm:$0xff]
    %v189 = vld [vmem:[#allocation2 + $0x4c8] sm:$0xff]
    %v190 = vld [vmem:[#allocation2 + $0x4d0] sm:$0xff]
    %v191 = vld [vmem:[#allocation2 + $0x4d8] sm:$0xff]
    %v192 = vld [vmem:[#allocation2 + $0x4e0] sm:$0xff]
    %v193 = vld [vmem:[#allocation2 + $0x4e8] sm:$0xff]
    %v194 = vld [vmem:[#allocation2 + $0x4f0] sm:$0xff]
    %v195 = vld [vmem:[#allocation2 + $0x4f8] sm:$0xff]
    %v196 = vld [vmem:[#allocation2 + $0x500] sm:$0xff]
    %v197 = vld [vmem:[#allocation2 + $0x508] sm:$0xff]
    %v198 = vld [vmem:[#allocation2 + $0x510] sm:$0xff]
    %v199 = vld [vmem:[#allocation2 + $0x518] sm:$0xff]
    %v200 = vld [vmem:[#allocation2 + $0x520] sm:$0xff]
    %v201 = vld [vmem:[#allocation2 + $0x528] sm:$0xff]
    %v202 = vld [vmem:[#allocation2 + $0x530] sm:$0xff]
    %v203 = vld [vmem:[#allocation2 + $0x538] sm:$0xff]
    %v204 = vld [vmem:[#allocation2 + $0x540] sm:$0xff]
    %v205 = vld [vmem:[#allocation2 + $0x548] sm:$0xff]
    %v206 = vld [vmem:[#allocation2 + $0x550] sm:$0xff]
    %v207 = vld [vmem:[#allocation2 + $0x558] sm:$0xff]
    %v208 = vld [vmem:[#allocation2 + $0x560] sm:$0xff]
    %v209 = vld [vmem:[#allocation2 + $0x568] sm:$0xff]
    %v210 = vld [vmem:[#allocation2 + $0x570] sm:$0xff]
    %v211 = vld [vmem:[#allocation2 + $0x578] sm:$0xff]
    %v212 = vld [vmem:[#allocation2 + $0x580] sm:$0xff]
    %v213 = vld [vmem:[#allocation2 + $0x588] sm:$0xff]
    %v214 = vld [vmem:[#allocation2 + $0x590] sm:$0xff]
    %v215 = vld [vmem:[#allocation2 + $0x598] sm:$0xff]
    %v216 = vld [vmem:[#allocation2 + $0x5a0] sm:$0xff]
    %v217 = vld [vmem:[#allocation2 + $0x5a8] sm:$0xff]
    %v218 = vld [vmem:[#allocation2 + $0x5b0] sm:$0xff]
    %v219 = vld [vmem:[#allocation2 + $0x5b8] sm:$0xff]
    %v220 = vld [vmem:[#allocation2 + $0x5c0] sm:$0xff]
    %v221 = vld [vmem:[#allocation2 + $0x5c8] sm:$0xff]
    %v222 = vld [vmem:[#allocation2 + $0x5d0] sm:$0xff]
    %v223 = vld [vmem:[#allocation2 + $0x5d8] sm:$0xff]
    %v224 = vld [vmem:[#allocation2 + $0x5e0] sm:$0xff]
    %v225 = vld [vmem:[#allocation2 + $0x5e8] sm:$0xff]
    %v226 = vld [vmem:[#allocation2 + $0x5f0] sm:$0xff]
    %v227 = vld [vmem:[#allocation2 + $0x5f8] sm:$0xff]
    %v228 = vld [vmem:[#allocation2 + $0x600] sm:$0xff]
    %v229 = vld [vmem:[#allocation2 + $0x608] sm:$0xff]
    %v230 = vld [vmem:[#allocation2 + $0x610] sm:$0xff]
    %v231 = vld [vmem:[#allocation2 + $0x618] sm:$0xff]
    %v232 = vld [vmem:[#allocation5] sm:$0xff]
    %v233 = vld [vmem:[#allocation5 + $0x8] sm:$0xff]
    %v234 = vld [vmem:[#allocation5 + $0x10] sm:$0xff]
    %v235 = vld [vmem:[#allocation5 + $0x18] sm:$0xff]
    %v236 = vld [vmem:[#allocation5 + $0x20] sm:$0xff]
    %v237 = vld [vmem:[#allocation5 + $0x28] sm:$0xff]
    %v238 = vld [vmem:[#allocation5 + $0x30] sm:$0xff]
    %v239 = vld [vmem:[#allocation5 + $0x38] sm:$0xff]
    %v240 = vld [vmem:[#allocation5 + $0x40] sm:$0xff]
    %v241 = vld [vmem:[#allocation5 + $0x48] sm:$0xff]
    %v242 = vld [vmem:[#allocation5 + $0x50] sm:$0xff]
    %v243 = vld [vmem:[#allocation5 + $0x58] sm:$0xff]
    %v244 = vld [vmem:[#allocation5 + $0x60] sm:$0xff]
    %v245 = vld [vmem:[#allocation5 + $0x68] sm:$0xff]
    %v246 = vld [vmem:[#allocation5 + $0x70] sm:$0xff]
    %v247 = vld [vmem:[#allocation5 + $0x78] sm:$0xff]
    %v248 = vld [vmem:[#allocation5 + $0x80] sm:$0xff]
    %v249 = vld [vmem:[#allocation5 + $0x88] sm:$0xff]
    %v250 = vld [vmem:[#allocation5 + $0x90] sm:$0xff]
    %v251 = vld [vmem:[#allocation5 + $0x98] sm:$0xff]
    %v252 = vld [vmem:[#allocation5 + $0xa0] sm:$0xff]
    %v253 = vld [vmem:[#allocation5 + $0xa8] sm:$0xff]
    %v254 = vld [vmem:[#allocation5 + $0xb0] sm:$0xff]
    %v255 = vld [vmem:[#allocation5 + $0xb8] sm:$0xff]
    %v256 = vld [vmem:[#allocation5 + $0xc0] sm:$0xff]
    %v257 = vld [vmem:[#allocation5 + $0xc8] sm:$0xff]
    %v258 = vld [vmem:[#allocation5 + $0xd0] sm:$0xff]
    %v259 = vld [vmem:[#allocation5 + $0xd8] sm:$0xff]
    %v260 = vld [vmem:[#allocation5 + $0xe0] sm:$0xff]
    %v261 = vld [vmem:[#allocation5 + $0xe8] sm:$0xff]
    %v262 = vld [vmem:[#allocation5 + $0xf0] sm:$0xff]
    %v263 = vld [vmem:[#allocation5 + $0xf8] sm:$0xff]
    %v264 = vld [vmem:[#allocation5 + $0x100] sm:$0xff]
    %v265 = vld [vmem:[#allocation5 + $0x108] sm:$0xff]
    %v266 = vld [vmem:[#allocation5 + $0x110] sm:$0xff]
    %v267 = vld [vmem:[#allocation5 + $0x118] sm:$0xff]
    %v268 = vld [vmem:[#allocation5 + $0x120] sm:$0xff]
    %v269 = vld [vmem:[#allocation5 + $0x128] sm:$0xff]
    %v270 = vld [vmem:[#allocation5 + $0x130] sm:$0xff]
    %v271 = vld [vmem:[#allocation5 + $0x138] sm:$0xff]
    %v272 = vld [vmem:[#allocation5 + $0x140] sm:$0xff]
    %v273 = vld [vmem:[#allocation5 + $0x148] sm:$0xff]
    %v274 = vld [vmem:[#allocation5 + $0x150] sm:$0xff]
    %v275 = vld [vmem:[#allocation5 + $0x158] sm:$0xff]
    %v276 = vld [vmem:[#allocation5 + $0x160] sm:$0xff]
    %v277 = vld [vmem:[#allocation5 + $0x168] sm:$0xff]
    %v278 = vld [vmem:[#allocation5 + $0x170] sm:$0xff]
    %v279 = vld [vmem:[#allocation5 + $0x178] sm:$0xff]
    %v280 = vld [vmem:[#allocation5 + $0x180] sm:$0xff]
    %v281 = vld [vmem:[#allocation5 + $0x188] sm:$0xff]
    %v282 = vld [vmem:[#allocation5 + $0x190] sm:$0xff]
    %v283 = vld [vmem:[#allocation5 + $0x198] sm:$0xff]
    %v284 = vld [vmem:[#allocation5 + $0x1a0] sm:$0xff]
    %v285 = vld [vmem:[#allocation5 + $0x1a8] sm:$0xff]
    %v286 = vld [vmem:[#allocation5 + $0x1b0] sm:$0xff]
    %v287 = vld [vmem:[#allocation5 + $0x1b8] sm:$0xff]
    %v288 = vld [vmem:[#allocation5 + $0x1c0] sm:$0xff]
    %v289 = vld [vmem:[#allocation5 + $0x1c8] sm:$0xff]
    %v290 = vld [vmem:[#allocation5 + $0x1d0] sm:$0xff]
    %v291 = vld [vmem:[#allocation5 + $0x1d8] sm:$0xff]
    %v292 = vld [vmem:[#allocation5 + $0x1e0] sm:$0xff]
    %v293 = vld [vmem:[#allocation5 + $0x1e8] sm:$0xff]
    %v294 = vld [vmem:[#allocation5 + $0x1f0] sm:$0xff]
    %v295 = vld [vmem:[#allocation5 + $0x1f8] sm:$0xff]
    %v296 = vld [vmem:[#allocation5 + $0x200] sm:$0xff]
    %v297 = vld [vmem:[#allocation5 + $0x208] sm:$0xff]
    %v298 = vld [vmem:[#allocation5 + $0x210] sm:$0xff]
    %v299 = vld [vmem:[#allocation5 + $0x218] sm:$0xff]
    %v300 = vld [vmem:[#allocation5 + $0x220] sm:$0xff]
    %v301 = vld [vmem:[#allocation5 + $0x228] sm:$0xff]
    %v302 = vld [vmem:[#allocation5 + $0x230] sm:$0xff]
    %v303 = vld [vmem:[#allocation5 + $0x238] sm:$0xff]
    %v304 = vld [vmem:[#allocation5 + $0x240] sm:$0xff]
    %v305 = vld [vmem:[#allocation5 + $0x248] sm:$0xff]
    %v306 = vld [vmem:[#allocation5 + $0x250] sm:$0xff]
    %v307 = vld [vmem:[#allocation5 + $0x258] sm:$0xff]
    %v308 = vld [vmem:[#allocation5 + $0x260] sm:$0xff]
    %v309 = vld [vmem:[#allocation5 + $0x268] sm:$0xff]
    %v310 = vld [vmem:[#allocation5 + $0x270] sm:$0xff]
    %v311 = vld [vmem:[#allocation5 + $0x278] sm:$0xff]
    %v312 = vld [vmem:[#allocation5 + $0x280] sm:$0xff]
    %v313 = vld [vmem:[#allocation5 + $0x288] sm:$0xff]
    %v314 = vld [vmem:[#allocation5 + $0x290] sm:$0xff]
    %v315 = vld [vmem:[#allocation5 + $0x298] sm:$0xff]
    %v316 = vld [vmem:[#allocation5 + $0x2a0] sm:$0xff]
    %v317 = vld [vmem:[#allocation5 + $0x2a8] sm:$0xff]
    %v318 = vld [vmem:[#allocation5 + $0x2b0] sm:$0xff]
    %v319 = vld [vmem:[#allocation5 + $0x2b8] sm:$0xff]
    %v320 = vld [vmem:[#allocation5 + $0x2c0] sm:$0xff]
    %v321 = vld [vmem:[#allocation5 + $0x2c8] sm:$0xff]
    %v322 = vld [vmem:[#allocation5 + $0x2d0] sm:$0xff]
    %v323 = vld [vmem:[#allocation5 + $0x2d8] sm:$0xff]
    %v324 = vld [vmem:[#allocation5 + $0x2e0] sm:$0xff]
    %v325 = vld [vmem:[#allocation5 + $0x2e8] sm:$0xff]
    %v326 = vld [vmem:[#allocation5 + $0x2f0] sm:$0xff]
    %v327 = vld [vmem:[#allocation5 + $0x2f8] sm:$0xff]
    %v328 = vld [vmem:[#allocation5 + $0x300] sm:$0xff]
    %v329 = vld [vmem:[#allocation5 + $0x308] sm:$0xff]
    %v330 = vld [vmem:[#allocation5 + $0x310] sm:$0xff]
    %v331 = vld [vmem:[#allocation5 + $0x318] sm:$0xff]
    %v332 = vld [vmem:[#allocation5 + $0x320] sm:$0xff]
    %v333 = vld [vmem:[#allocation5 + $0x328] sm:$0xff]
    %v334 = vld [vmem:[#allocation5 + $0x330] sm:$0xff]
    %v335 = vld [vmem:[#allocation5 + $0x338] sm:$0xff]
    %v336 = vld [vmem:[#allocation5 + $0x340] sm:$0xff]
    %v337 = vld [vmem:[#allocation5 + $0x348] sm:$0xff]
    %v338 = vld [vmem:[#allocation5 + $0x350] sm:$0xff]
    %v339 = vld [vmem:[#allocation5 + $0x358] sm:$0xff]
    %v340 = vld [vmem:[#allocation5 + $0x360] sm:$0xff]
    %v341 = vld [vmem:[#allocation5 + $0x368] sm:$0xff]
    %v342 = vld [vmem:[#allocation5 + $0x370] sm:$0xff]
    %v343 = vld [vmem:[#allocation5 + $0x378] sm:$0xff]
    %v344 = vld [vmem:[#allocation5 + $0x380] sm:$0xff]
    %v345 = vld [vmem:[#allocation5 + $0x388] sm:$0xff]
    %v346 = vld [vmem:[#allocation5 + $0x390] sm:$0xff]
    %v347 = vld [vmem:[#allocation5 + $0x398] sm:$0xff]
    %v348 = vld [vmem:[#allocation5 + $0x3a0] sm:$0xff]
    %v349 = vld [vmem:[#allocation5 + $0x3a8] sm:$0xff]
    %v350 = vld [vmem:[#allocation5 + $0x3b0] sm:$0xff]
    %v351 = vld [vmem:[#allocation5 + $0x3b8] sm:$0xff]
    %v352 = vld [vmem:[#allocation5 + $0x3c0] sm:$0xff]
    %v353 = vld [vmem:[#allocation5 + $0x3c8] sm:$0xff]
    %v354 = vld [vmem:[#allocation5 + $0x3d0] sm:$0xff]
    %v355 = vld [vmem:[#allocation5 + $0x3d8] sm:$0xff]
    %v356 = vld [vmem:[#allocation5 + $0x3e0] sm:$0xff]
    %v357 = vld [vmem:[#allocation5 + $0x3e8] sm:$0xff]
    %v358 = vld [vmem:[#allocation5 + $0x3f0] sm:$0xff]
    %v359 = vld [vmem:[#allocation5 + $0x3f8] sm:$0xff]
    %v360 = vld [vmem:[#allocation5 + $0x400] sm:$0xff]
    %v361 = vld [vmem:[#allocation5 + $0x408] sm:$0xff]
    %v362 = vld [vmem:[#allocation5 + $0x410] sm:$0xff]
    %v363 = vld [vmem:[#allocation5 + $0x418] sm:$0xff]
    %v364 = vld [vmem:[#allocation5 + $0x420] sm:$0xff]
    %v365 = vld [vmem:[#allocation5 + $0x428] sm:$0xff]
    %v366 = vld [vmem:[#allocation5 + $0x430] sm:$0xff]
    %v367 = vld [vmem:[#allocation5 + $0x438] sm:$0xff]
    %v368 = vld [vmem:[#allocation5 + $0x440] sm:$0xff]
    %v369 = vld [vmem:[#allocation5 + $0x448] sm:$0xff]
    %v370 = vld [vmem:[#allocation5 + $0x450] sm:$0xff]
    %v371 = vld [vmem:[#allocation5 + $0x458] sm:$0xff]
    %v372 = vld [vmem:[#allocation5 + $0x460] sm:$0xff]
    %v373 = vld [vmem:[#allocation5 + $0x468] sm:$0xff]
    %v374 = vld [vmem:[#allocation5 + $0x470] sm:$0xff]
    %v375 = vld [vmem:[#allocation5 + $0x478] sm:$0xff]
    %v376 = vld [vmem:[#allocation5 + $0x480] sm:$0xff]
    %v377 = vld [vmem:[#allocation5 + $0x488] sm:$0xff]
    %v378 = vld [vmem:[#allocation5 + $0x490] sm:$0xff]
    %v379 = vld [vmem:[#allocation5 + $0x498] sm:$0xff]
    %v380 = vld [vmem:[#allocation5 + $0x4a0] sm:$0xff]
    %v381 = vld [vmem:[#allocation5 + $0x4a8] sm:$0xff]
    %v382 = vld [vmem:[#allocation5 + $0x4b0] sm:$0xff]
    %v383 = vld [vmem:[#allocation5 + $0x4b8] sm:$0xff]
    %v384 = vld [vmem:[#allocation5 + $0x4c0] sm:$0xff]
    %v385 = vld [vmem:[#allocation5 + $0x4c8] sm:$0xff]
    %v386 = vld [vmem:[#allocation5 + $0x4d0] sm:$0xff]
    %v387 = vld [vmem:[#allocation5 + $0x4d8] sm:$0xff]
    %v388 = vld [vmem:[#allocation5 + $0x4e0] sm:$0xff]
    %v389 = vld [vmem:[#allocation5 + $0x4e8] sm:$0xff]
    %v390 = vld [vmem:[#allocation5 + $0x4f0] sm:$0xff]
    %v391 = vld [vmem:[#allocation5 + $0x4f8] sm:$0xff]
    %v392 = vld [vmem:[#allocation5 + $0x500] sm:$0xff]
    %v393 = vld [vmem:[#allocation5 + $0x508] sm:$0xff]
    %v394 = vld [vmem:[#allocation5 + $0x510] sm:$0xff]
    %v395 = vld [vmem:[#allocation5 + $0x518] sm:$0xff]
    %v396 = vld [vmem:[#allocation5 + $0x520] sm:$0xff]
    %v397 = vld [vmem:[#allocation5 + $0x528] sm:$0xff]
    %v398 = vld [vmem:[#allocation5 + $0x530] sm:$0xff]
    %v399 = vld [vmem:[#allocation5 + $0x538] sm:$0xff]
    %v400 = vld [vmem:[#allocation5 + $0x540] sm:$0xff]
    %v401 = vld [vmem:[#allocation5 + $0x548] sm:$0xff]
    %v402 = vld [vmem:[#allocation5 + $0x550] sm:$0xff]
    %v403 = vld [vmem:[#allocation5 + $0x558] sm:$0xff]
    %v404 = vld [vmem:[#allocation5 + $0x560] sm:$0xff]
    %v405 = vld [vmem:[#allocation5 + $0x568] sm:$0xff]
    %v406 = vld [vmem:[#allocation5 + $0x570] sm:$0xff]
    %v407 = vld [vmem:[#allocation5 + $0x578] sm:$0xff]
    %v408 = vld [vmem:[#allocation5 + $0x580] sm:$0xff]
    %v409 = vld [vmem:[#allocation5 + $0x588] sm:$0xff]
    %v410 = vld [vmem:[#allocation5 + $0x590] sm:$0xff]
    %v411 = vld [vmem:[#allocation5 + $0x598] sm:$0xff]
    %v412 = vld [vmem:[#allocation5 + $0x5a0] sm:$0xff]
    %v413 = vld [vmem:[#allocation5 + $0x5a8] sm:$0xff]
    %v414 = vld [vmem:[#allocation5 + $0x5b0] sm:$0xff]
    %v415 = vld [vmem:[#allocation5 + $0x5b8] sm:$0xff]
    %v416 = vld [vmem:[#allocation5 + $0x5c0] sm:$0xff]
    %v417 = vld [vmem:[#allocation5 + $0x5c8] sm:$0xff]
    %v418 = vld [vmem:[#allocation5 + $0x5d0] sm:$0xff]
    %v419 = vld [vmem:[#allocation5 + $0x5d8] sm:$0xff]
    %v420 = vld [vmem:[#allocation5 + $0x5e0] sm:$0xff]
    %v421 = vld [vmem:[#allocation5 + $0x5e8] sm:$0xff]
    %v422 = vld [vmem:[#allocation5 + $0x5f0] sm:$0xff]
    %v423 = vld [vmem:[#allocation5 + $0x5f8] sm:$0xff]
    %v424 = vld [vmem:[#allocation5 + $0x600] sm:$0xff]
    %v425 = vld [vmem:[#allocation5 + $0x608] sm:$0xff]
    %v426 = vld [vmem:[#allocation5 + $0x610] sm:$0xff]
    %v427 = vld [vmem:[#allocation5 + $0x618] sm:$0xff]
    %v428 = vadd.f32 %v36, %v232
    %v429 = vadd.f32 %v37, %v233
    %v430 = vadd.f32 %v38, %v234
    %v431 = vadd.f32 %v39, %v235
    %v432 = vadd.f32 %v40, %v236
    %v433 = vadd.f32 %v41, %v237
    %v434 = vadd.f32 %v42, %v238
    %v435 = vadd.f32 %v43, %v239
    %v436 = vadd.f32 %v44, %v240
    %v437 = vadd.f32 %v45, %v241
    %v438 = vadd.f32 %v46, %v242
    %v439 = vadd.f32 %v47, %v243
    %v440 = vadd.f32 %v48, %v244
    %v441 = vadd.f32 %v49, %v245
    %v442 = vadd.f32 %v50, %v246
    %v443 = vadd.f32 %v51, %v247
    %v444 = vadd.f32 %v52, %v248
    %v445 = vadd.f32 %v53, %v249
    %v446 = vadd.f32 %v54, %v250
    %v447 = vadd.f32 %v55, %v251
    %v448 = vadd.f32 %v56, %v252
    %v449 = vadd.f32 %v57, %v253
    %v450 = vadd.f32 %v58, %v254
    %v451 = vadd.f32 %v59, %v255
    %v452 = vadd.f32 %v60, %v256
    %v453 = vadd.f32 %v61, %v257
    %v454 = vadd.f32 %v62, %v258
    %v455 = vadd.f32 %v63, %v259
    %v456 = vadd.f32 %v64, %v260
    %v457 = vadd.f32 %v65, %v261
    %v458 = vadd.f32 %v66, %v262
    %v459 = vadd.f32 %v67, %v263
    %v460 = vadd.f32 %v68, %v264
    %v461 = vadd.f32 %v69, %v265
    %v462 = vadd.f32 %v70, %v266
    %v463 = vadd.f32 %v71, %v267
    %v464 = vadd.f32 %v72, %v268
    %v465 = vadd.f32 %v73, %v269
    %v466 = vadd.f32 %v74, %v270
    %v467 = vadd.f32 %v75, %v271
    %v468 = vadd.f32 %v76, %v272
    %v469 = vadd.f32 %v77, %v273
    %v470 = vadd.f32 %v78, %v274
    %v471 = vadd.f32 %v79, %v275
    %v472 = vadd.f32 %v80, %v276
    %v473 = vadd.f32 %v81, %v277
    %v474 = vadd.f32 %v82, %v278
    %v475 = vadd.f32 %v83, %v279
    %v476 = vadd.f32 %v84, %v280
    %v477 = vadd.f32 %v85, %v281
    %v478 = vadd.f32 %v86, %v282
    %v479 = vadd.f32 %v87, %v283
    %v480 = vadd.f32 %v88, %v284
    %v481 = vadd.f32 %v89, %v285
    %v482 = vadd.f32 %v90, %v286
    %v483 = vadd.f32 %v91, %v287
    %v484 = vadd.f32 %v92, %v288
    %v485 = vadd.f32 %v93, %v289
    %v486 = vadd.f32 %v94, %v290
    %v487 = vadd.f32 %v95, %v291
    %v488 = vadd.f32 %v96, %v292
    %v489 = vadd.f32 %v97, %v293
    %v490 = vadd.f32 %v98, %v294
    %v491 = vadd.f32 %v99, %v295
    %v492 = vadd.f32 %v100, %v296
    %v493 = vadd.f32 %v101, %v297
    %v494 = vadd.f32 %v102, %v298
    %v495 = vadd.f32 %v103, %v299
    %v496 = vadd.f32 %v104, %v300
    %v497 = vadd.f32 %v105, %v301
    %v498 = vadd.f32 %v106, %v302
    %v499 = vadd.f32 %v107, %v303
    %v500 = vadd.f32 %v108, %v304
    %v501 = vadd.f32 %v109, %v305
    %v502 = vadd.f32 %v110, %v306
    %v503 = vadd.f32 %v111, %v307
    %v504 = vadd.f32 %v112, %v308
    %v505 = vadd.f32 %v113, %v309
    %v506 = vadd.f32 %v114, %v310
    %v507 = vadd.f32 %v115, %v311
    %v508 = vadd.f32 %v116, %v312
    %v509 = vadd.f32 %v117, %v313
    %v510 = vadd.f32 %v118, %v314
    %v511 = vadd.f32 %v119, %v315
    %v512 = vadd.f32 %v120, %v316
    %v513 = vadd.f32 %v121, %v317
    %v514 = vadd.f32 %v122, %v318
    %v515 = vadd.f32 %v123, %v319
    %v516 = vadd.f32 %v124, %v320
    %v517 = vadd.f32 %v125, %v321
    %v518 = vadd.f32 %v126, %v322
    %v519 = vadd.f32 %v127, %v323
    %v520 = vadd.f32 %v128, %v324
    %v521 = vadd.f32 %v129, %v325
    %v522 = vadd.f32 %v130, %v326
    %v523 = vadd.f32 %v131, %v327
    %v524 = vadd.f32 %v132, %v328
    %v525 = vadd.f32 %v133, %v329
    %v526 = vadd.f32 %v134, %v330
    %v527 = vadd.f32 %v135, %v331
    %v528 = vadd.f32 %v136, %v332
    %v529 = vadd.f32 %v137, %v333
    %v530 = vadd.f32 %v138, %v334
    %v531 = vadd.f32 %v139, %v335
    %v532 = vadd.f32 %v140, %v336
    %v533 = vadd.f32 %v141, %v337
    %v534 = vadd.f32 %v142, %v338
    %v535 = vadd.f32 %v143, %v339
    %v536 = vadd.f32 %v144, %v340
    %v537 = vadd.f32 %v145, %v341
    %v538 = vadd.f32 %v146, %v342
    %v539 = vadd.f32 %v147, %v343
    %v540 = vadd.f32 %v148, %v344
    %v541 = vadd.f32 %v149, %v345
    %v542 = vadd.f32 %v150, %v346
    %v543 = vadd.f32 %v151, %v347
    %v544 = vadd.f32 %v152, %v348
    %v545 = vadd.f32 %v153, %v349
    %v546 = vadd.f32 %v154, %v350
    %v547 = vadd.f32 %v155, %v351
    %v548 = vadd.f32 %v156, %v352
    %v549 = vadd.f32 %v157, %v353
    %v550 = vadd.f32 %v158, %v354
    %v551 = vadd.f32 %v159, %v355
    %v552 = vadd.f32 %v160, %v356
    %v553 = vadd.f32 %v161, %v357
    %v554 = vadd.f32 %v162, %v358
    %v555 = vadd.f32 %v163, %v359
    %v556 = vadd.f32 %v164, %v360
    %v557 = vadd.f32 %v165, %v361
    %v558 = vadd.f32 %v166, %v362
    %v559 = vadd.f32 %v167, %v363
    %v560 = vadd.f32 %v168, %v364
    %v561 = vadd.f32 %v169, %v365
    %v562 = vadd.f32 %v170, %v366
    %v563 = vadd.f32 %v171, %v367
    %v564 = vadd.f32 %v172, %v368
    %v565 = vadd.f32 %v173, %v369
    %v566 = vadd.f32 %v174, %v370
    %v567 = vadd.f32 %v175, %v371
    %v568 = vadd.f32 %v176, %v372
    %v569 = vadd.f32 %v177, %v373
    %v570 = vadd.f32 %v178, %v374
    %v571 = vadd.f32 %v179, %v375
    %v572 = vadd.f32 %v180, %v376
    %v573 = vadd.f32 %v181, %v377
    %v574 = vadd.f32 %v182, %v378
    %v575 = vadd.f32 %v183, %v379
    %v576 = vadd.f32 %v184, %v380
    %v577 = vadd.f32 %v185, %v381
    %v578 = vadd.f32 %v186, %v382
    %v579 = vadd.f32 %v187, %v383
    %v580 = vadd.f32 %v188, %v384
    %v581 = vadd.f32 %v189, %v385
    %v582 = vadd.f32 %v190, %v386
    %v583 = vadd.f32 %v191, %v387
    %v584 = vadd.f32 %v192, %v388
    %v585 = vadd.f32 %v193, %v389
    %v586 = vadd.f32 %v194, %v390
    %v587 = vadd.f32 %v195, %v391
    %v588 = vadd.f32 %v196, %v392
    %v589 = vadd.f32 %v197, %v393
    %v590 = vadd.f32 %v198, %v394
    %v591 = vadd.f32 %v199, %v395
    %v592 = vadd.f32 %v200, %v396
    %v593 = vadd.f32 %v201, %v397
    %v594 = vadd.f32 %v202, %v398
    %v595 = vadd.f32 %v203, %v399
    %v596 = vadd.f32 %v204, %v400
    %v597 = vadd.f32 %v205, %v401
    %v598 = vadd.f32 %v206, %v402
    %v599 = vadd.f32 %v207, %v403
    %v600 = vadd.f32 %v208, %v404
    %v601 = vadd.f32 %v209, %v405
    %v602 = vadd.f32 %v210, %v406
    %v603 = vadd.f32 %v211, %v407
    %v604 = vadd.f32 %v212, %v408
    %v605 = vadd.f32 %v213, %v409
    %v606 = vadd.f32 %v214, %v410
    %v607 = vadd.f32 %v215, %v411
    %v608 = vadd.f32 %v216, %v412
    %v609 = vadd.f32 %v217, %v413
    %v610 = vadd.f32 %v218, %v414
    %v611 = vadd.f32 %v219, %v415
    %v612 = vadd.f32 %v220, %v416
    %v613 = vadd.f32 %v221, %v417
    %v614 = vadd.f32 %v222, %v418
    %v615 = vadd.f32 %v223, %v419
    %v616 = vadd.f32 %v224, %v420
    %v617 = vadd.f32 %v225, %v421
    %v618 = vadd.f32 %v226, %v422
    %v619 = vadd.f32 %v227, %v423
    %v620 = vadd.f32 %v228, %v424
    %v621 = vadd.f32 %v229, %v425
    %v622 = vadd.f32 %v230, %v426
    %v623 = vadd.f32 %v231, %v427
    %v624 = vmax.f32 %v428, 0.0
    %v625 = vmax.f32 %v429, 0.0
    %v626 = vmax.f32 %v430, 0.0
    %v627 = vmax.f32 %v431, 0.0
    %v628 = vmax.f32 %v432, 0.0
    %v629 = vmax.f32 %v433, 0.0
    %v630 = vmax.f32 %v434, 0.0
    %v631 = vmax.f32 %v435, 0.0
    %v632 = vmax.f32 %v436, 0.0
    %v633 = vmax.f32 %v437, 0.0
    %v634 = vmax.f32 %v438, 0.0
    %v635 = vmax.f32 %v439, 0.0
    %v636 = vmax.f32 %v440, 0.0
    %v637 = vmax.f32 %v441, 0.0
    %v638 = vmax.f32 %v442, 0.0
    %v639 = vmax.f32 %v443, 0.0
    %v640 = vmax.f32 %v444, 0.0
    %v641 = vmax.f32 %v445, 0.0
    %v642 = vmax.f32 %v446, 0.0
    %v643 = vmax.f32 %v447, 0.0
    %v644 = vmax.f32 %v448, 0.0
    %v645 = vmax.f32 %v449, 0.0
    %v646 = vmax.f32 %v450, 0.0
    %v647 = vmax.f32 %v451, 0.0
    %v648 = vmax.f32 %v452, 0.0
    %v649 = vmax.f32 %v453, 0.0
    %v650 = vmax.f32 %v454, 0.0
    %v651 = vmax.f32 %v455, 0.0
    %v652 = vmax.f32 %v456, 0.0
    %v653 = vmax.f32 %v457, 0.0
    %v654 = vmax.f32 %v458, 0.0
    %v655 = vmax.f32 %v459, 0.0
    %v656 = vmax.f32 %v460, 0.0
    %v657 = vmax.f32 %v461, 0.0
    %v658 = vmax.f32 %v462, 0.0
    %v659 = vmax.f32 %v463, 0.0
    %v660 = vmax.f32 %v464, 0.0
    %v661 = vmax.f32 %v465, 0.0
    %v662 = vmax.f32 %v466, 0.0
    %v663 = vmax.f32 %v467, 0.0
    %v664 = vmax.f32 %v468, 0.0
    %v665 = vmax.f32 %v469, 0.0
    %v666 = vmax.f32 %v470, 0.0
    %v667 = vmax.f32 %v471, 0.0
    %v668 = vmax.f32 %v472, 0.0
    %v669 = vmax.f32 %v473, 0.0
    %v670 = vmax.f32 %v474, 0.0
    %v671 = vmax.f32 %v475, 0.0
    %v672 = vmax.f32 %v476, 0.0
    %v673 = vmax.f32 %v477, 0.0
    %v674 = vmax.f32 %v478, 0.0
    %v675 = vmax.f32 %v479, 0.0
    %v676 = vmax.f32 %v480, 0.0
    %v677 = vmax.f32 %v481, 0.0
    %v678 = vmax.f32 %v482, 0.0
    %v679 = vmax.f32 %v483, 0.0
    %v680 = vmax.f32 %v484, 0.0
    %v681 = vmax.f32 %v485, 0.0
    %v682 = vmax.f32 %v486, 0.0
    %v683 = vmax.f32 %v487, 0.0
    %v684 = vmax.f32 %v488, 0.0
    %v685 = vmax.f32 %v489, 0.0
    %v686 = vmax.f32 %v490, 0.0
    %v687 = vmax.f32 %v491, 0.0
    %v688 = vmax.f32 %v492, 0.0
    %v689 = vmax.f32 %v493, 0.0
    %v690 = vmax.f32 %v494, 0.0
    %v691 = vmax.f32 %v495, 0.0
    %v692 = vmax.f32 %v496, 0.0
    %v693 = vmax.f32 %v497, 0.0
    %v694 = vmax.f32 %v498, 0.0
    %v695 = vmax.f32 %v499, 0.0
    %v696 = vmax.f32 %v500, 0.0
    %v697 = vmax.f32 %v501, 0.0
    %v698 = vmax.f32 %v502, 0.0
    %v699 = vmax.f32 %v503, 0.0
    %v700 = vmax.f32 %v504, 0.0
    %v701 = vmax.f32 %v505, 0.0
    %v702 = vmax.f32 %v506, 0.0
    %v703 = vmax.f32 %v507, 0.0
    %v704 = vmax.f32 %v508, 0.0
    %v705 = vmax.f32 %v509, 0.0
    %v706 = vmax.f32 %v510, 0.0
    %v707 = vmax.f32 %v511, 0.0
    %v708 = vmax.f32 %v512, 0.0
    %v709 = vmax.f32 %v513, 0.0
    %v710 = vmax.f32 %v514, 0.0
    %v711 = vmax.f32 %v515, 0.0
    %v712 = vmax.f32 %v516, 0.0
    %v713 = vmax.f32 %v517, 0.0
    %v714 = vmax.f32 %v518, 0.0
    %v715 = vmax.f32 %v519, 0.0
    %v716 = vmax.f32 %v520, 0.0
    %v717 = vmax.f32 %v521, 0.0
    %v718 = vmax.f32 %v522, 0.0
    %v719 = vmax.f32 %v523, 0.0
    %v720 = vmax.f32 %v524, 0.0
    %v721 = vmax.f32 %v525, 0.0
    %v722 = vmax.f32 %v526, 0.0
    %v723 = vmax.f32 %v527, 0.0
    %v724 = vmax.f32 %v528, 0.0
    %v725 = vmax.f32 %v529, 0.0
    %v726 = vmax.f32 %v530, 0.0
    %v727 = vmax.f32 %v531, 0.0
    %v728 = vmax.f32 %v532, 0.0
    %v729 = vmax.f32 %v533, 0.0
    %v730 = vmax.f32 %v534, 0.0
    %v731 = vmax.f32 %v535, 0.0
    %v732 = vmax.f32 %v536, 0.0
    %v733 = vmax.f32 %v537, 0.0
    %v734 = vmax.f32 %v538, 0.0
    %v735 = vmax.f32 %v539, 0.0
    %v736 = vmax.f32 %v540, 0.0
    %v737 = vmax.f32 %v541, 0.0
    %v738 = vmax.f32 %v542, 0.0
    %v739 = vmax.f32 %v543, 0.0
    %v740 = vmax.f32 %v544, 0.0
    %v741 = vmax.f32 %v545, 0.0
    %v742 = vmax.f32 %v546, 0.0
    %v743 = vmax.f32 %v547, 0.0
    %v744 = vmax.f32 %v548, 0.0
    %v745 = vmax.f32 %v549, 0.0
    %v746 = vmax.f32 %v550, 0.0
    %v747 = vmax.f32 %v551, 0.0
    %v748 = vmax.f32 %v552, 0.0
    %v749 = vmax.f32 %v553, 0.0
    %v750 = vmax.f32 %v554, 0.0
    %v751 = vmax.f32 %v555, 0.0
    %v752 = vmax.f32 %v556, 0.0
    %v753 = vmax.f32 %v557, 0.0
    %v754 = vmax.f32 %v558, 0.0
    %v755 = vmax.f32 %v559, 0.0
    %v756 = vmax.f32 %v560, 0.0
    %v757 = vmax.f32 %v561, 0.0
    %v758 = vmax.f32 %v562, 0.0
    %v759 = vmax.f32 %v563, 0.0
    %v760 = vmax.f32 %v564, 0.0
    %v761 = vmax.f32 %v565, 0.0
    %v762 = vmax.f32 %v566, 0.0
    %v763 = vmax.f32 %v567, 0.0
    %v764 = vmax.f32 %v568, 0.0
    %v765 = vmax.f32 %v569, 0.0
    %v766 = vmax.f32 %v570, 0.0
    %v767 = vmax.f32 %v571, 0.0
    %v768 = vmax.f32 %v572, 0.0
    %v769 = vmax.f32 %v573, 0.0
    %v770 = vmax.f32 %v574, 0.0
    %v771 = vmax.f32 %v575, 0.0
    %v772 = vmax.f32 %v576, 0.0
    %v773 = vmax.f32 %v577, 0.0
    %v774 = vmax.f32 %v578, 0.0
    %v775 = vmax.f32 %v579, 0.0
    %v776 = vmax.f32 %v580, 0.0
    %v777 = vmax.f32 %v581, 0.0
    %v778 = vmax.f32 %v582, 0.0
    %v779 = vmax.f32 %v583, 0.0
    %v780 = vmax.f32 %v584, 0.0
    %v781 = vmax.f32 %v585, 0.0
    %v782 = vmax.f32 %v586, 0.0
    %v783 = vmax.f32 %v587, 0.0
    %v784 = vmax.f32 %v588, 0.0
    %v785 = vmax.f32 %v589, 0.0
    %v786 = vmax.f32 %v590, 0.0
    %v787 = vmax.f32 %v591, 0.0
    %v788 = vmax.f32 %v592, 0.0
    %v789 = vmax.f32 %v593, 0.0
    %v790 = vmax.f32 %v594, 0.0
    %v791 = vmax.f32 %v595, 0.0
    %v792 = vmax.f32 %v596, 0.0
    %v793 = vmax.f32 %v597, 0.0
    %v794 = vmax.f32 %v598, 0.0
    %v795 = vmax.f32 %v599, 0.0
    %v796 = vmax.f32 %v600, 0.0
    %v797 = vmax.f32 %v601, 0.0
    %v798 = vmax.f32 %v602, 0.0
    %v799 = vmax.f32 %v603, 0.0
    %v800 = vmax.f32 %v604, 0.0
    %v801 = vmax.f32 %v605, 0.0
    %v802 = vmax.f32 %v606, 0.0
    %v803 = vmax.f32 %v607, 0.0
    %v804 = vmax.f32 %v608, 0.0
    %v805 = vmax.f32 %v609, 0.0
    %v806 = vmax.f32 %v610, 0.0
    %v807 = vmax.f32 %v611, 0.0
    %v808 = vmax.f32 %v612, 0.0
    %v809 = vmax.f32 %v613, 0.0
    %v810 = vmax.f32 %v614, 0.0
    %v811 = vmax.f32 %v615, 0.0
    %v812 = vmax.f32 %v616, 0.0
    %v813 = vmax.f32 %v617, 0.0
    %v814 = vmax.f32 %v618, 0.0
    %v815 = vmax.f32 %v619, 0.0
    %v816 = vmax.f32 %v620, 0.0
    %v817 = vmax.f32 %v621, 0.0
    %v818 = vmax.f32 %v622, 0.0
    %v819 = vmax.f32 %v623, 0.0
    %820 = vst [vmem:[#allocation7] sm:$0xff] %v624
    %821 = vst [vmem:[#allocation7 + $0x8] sm:$0xff] %v625
    %822 = vst [vmem:[#allocation7 + $0x10] sm:$0xff] %v626
    %823 = vst [vmem:[#allocation7 + $0x18] sm:$0xff] %v627
    %824 = vst [vmem:[#allocation7 + $0x20] sm:$0xff] %v628
    %825 = vst [vmem:[#allocation7 + $0x28] sm:$0xff] %v629
    %826 = vst [vmem:[#allocation7 + $0x30] sm:$0xff] %v630
    %827 = vst [vmem:[#allocation7 + $0x38] sm:$0xff] %v631
    %828 = vst [vmem:[#allocation7 + $0x40] sm:$0xff] %v632
    %829 = vst [vmem:[#allocation7 + $0x48] sm:$0xff] %v633
    %830 = vst [vmem:[#allocation7 + $0x50] sm:$0xff] %v634
    %831 = vst [vmem:[#allocation7 + $0x58] sm:$0xff] %v635
    %832 = vst [vmem:[#allocation7 + $0x60] sm:$0xff] %v636
    %833 = vst [vmem:[#allocation7 + $0x68] sm:$0xff] %v637
    %834 = vst [vmem:[#allocation7 + $0x70] sm:$0xff] %v638
    %835 = vst [vmem:[#allocation7 + $0x78] sm:$0xff] %v639
    %836 = vst [vmem:[#allocation7 + $0x80] sm:$0xff] %v640
    %837 = vst [vmem:[#allocation7 + $0x88] sm:$0xff] %v641
    %838 = vst [vmem:[#allocation7 + $0x90] sm:$0xff] %v642
    %839 = vst [vmem:[#allocation7 + $0x98] sm:$0xff] %v643
    %840 = vst [vmem:[#allocation7 + $0xa0] sm:$0xff] %v644
    %841 = vst [vmem:[#allocation7 + $0xa8] sm:$0xff] %v645
    %842 = vst [vmem:[#allocation7 + $0xb0] sm:$0xff] %v646
    %843 = vst [vmem:[#allocation7 + $0xb8] sm:$0xff] %v647
    %844 = vst [vmem:[#allocation7 + $0xc0] sm:$0xff] %v648
    %845 = vst [vmem:[#allocation7 + $0xc8] sm:$0xff] %v649
    %846 = vst [vmem:[#allocation7 + $0xd0] sm:$0xff] %v650
    %847 = vst [vmem:[#allocation7 + $0xd8] sm:$0xff] %v651
    %848 = vst [vmem:[#allocation7 + $0xe0] sm:$0xff] %v652
    %849 = vst [vmem:[#allocation7 + $0xe8] sm:$0xff] %v653
    %850 = vst [vmem:[#allocation7 + $0xf0] sm:$0xff] %v654
    %851 = vst [vmem:[#allocation7 + $0xf8] sm:$0xff] %v655
    %852 = vst [vmem:[#allocation7 + $0x100] sm:$0xff] %v656
    %853 = vst [vmem:[#allocation7 + $0x108] sm:$0xff] %v657
    %854 = vst [vmem:[#allocation7 + $0x110] sm:$0xff] %v658
    %855 = vst [vmem:[#allocation7 + $0x118] sm:$0xff] %v659
    %856 = vst [vmem:[#allocation7 + $0x120] sm:$0xff] %v660
    %857 = vst [vmem:[#allocation7 + $0x128] sm:$0xff] %v661
    %858 = vst [vmem:[#allocation7 + $0x130] sm:$0xff] %v662
    %859 = vst [vmem:[#allocation7 + $0x138] sm:$0xff] %v663
    %860 = vst [vmem:[#allocation7 + $0x140] sm:$0xff] %v664
    %861 = vst [vmem:[#allocation7 + $0x148] sm:$0xff] %v665
    %862 = vst [vmem:[#allocation7 + $0x150] sm:$0xff] %v666
    %863 = vst [vmem:[#allocation7 + $0x158] sm:$0xff] %v667
    %864 = vst [vmem:[#allocation7 + $0x160] sm:$0xff] %v668
    %865 = vst [vmem:[#allocation7 + $0x168] sm:$0xff] %v669
    %866 = vst [vmem:[#allocation7 + $0x170] sm:$0xff] %v670
    %867 = vst [vmem:[#allocation7 + $0x178] sm:$0xff] %v671
    %868 = vst [vmem:[#allocation7 + $0x180] sm:$0xff] %v672
    %869 = vst [vmem:[#allocation7 + $0x188] sm:$0xff] %v673
    %870 = vst [vmem:[#allocation7 + $0x190] sm:$0xff] %v674
    %871 = vst [vmem:[#allocation7 + $0x198] sm:$0xff] %v675
    %872 = vst [vmem:[#allocation7 + $0x1a0] sm:$0xff] %v676
    %873 = vst [vmem:[#allocation7 + $0x1a8] sm:$0xff] %v677
    %874 = vst [vmem:[#allocation7 + $0x1b0] sm:$0xff] %v678
    %875 = vst [vmem:[#allocation7 + $0x1b8] sm:$0xff] %v679
    %876 = vst [vmem:[#allocation7 + $0x1c0] sm:$0xff] %v680
    %877 = vst [vmem:[#allocation7 + $0x1c8] sm:$0xff] %v681
    %878 = vst [vmem:[#allocation7 + $0x1d0] sm:$0xff] %v682
    %879 = vst [vmem:[#allocation7 + $0x1d8] sm:$0xff] %v683
    %880 = vst [vmem:[#allocation7 + $0x1e0] sm:$0xff] %v684
    %881 = vst [vmem:[#allocation7 + $0x1e8] sm:$0xff] %v685
    %882 = vst [vmem:[#allocation7 + $0x1f0] sm:$0xff] %v686
    %883 = vst [vmem:[#allocation7 + $0x1f8] sm:$0xff] %v687
    %884 = vst [vmem:[#allocation7 + $0x200] sm:$0xff] %v688
    %885 = vst [vmem:[#allocation7 + $0x208] sm:$0xff] %v689
    %886 = vst [vmem:[#allocation7 + $0x210] sm:$0xff] %v690
    %887 = vst [vmem:[#allocation7 + $0x218] sm:$0xff] %v691
    %888 = vst [vmem:[#allocation7 + $0x220] sm:$0xff] %v692
    %889 = vst [vmem:[#allocation7 + $0x228] sm:$0xff] %v693
    %890 = vst [vmem:[#allocation7 + $0x230] sm:$0xff] %v694
    %891 = vst [vmem:[#allocation7 + $0x238] sm:$0xff] %v695
    %892 = vst [vmem:[#allocation7 + $0x240] sm:$0xff] %v696
    %893 = vst [vmem:[#allocation7 + $0x248] sm:$0xff] %v697
    %894 = vst [vmem:[#allocation7 + $0x250] sm:$0xff] %v698
    %895 = vst [vmem:[#allocation7 + $0x258] sm:$0xff] %v699
    %896 = vst [vmem:[#allocation7 + $0x260] sm:$0xff] %v700
    %897 = vst [vmem:[#allocation7 + $0x268] sm:$0xff] %v701
    %898 = vst [vmem:[#allocation7 + $0x270] sm:$0xff] %v702
    %899 = vst [vmem:[#allocation7 + $0x278] sm:$0xff] %v703
    %900 = vst [vmem:[#allocation7 + $0x280] sm:$0xff] %v704
    %901 = vst [vmem:[#allocation7 + $0x288] sm:$0xff] %v705
    %902 = vst [vmem:[#allocation7 + $0x290] sm:$0xff] %v706
    %903 = vst [vmem:[#allocation7 + $0x298] sm:$0xff] %v707
    %904 = vst [vmem:[#allocation7 + $0x2a0] sm:$0xff] %v708
    %905 = vst [vmem:[#allocation7 + $0x2a8] sm:$0xff] %v709
    %906 = vst [vmem:[#allocation7 + $0x2b0] sm:$0xff] %v710
    %907 = vst [vmem:[#allocation7 + $0x2b8] sm:$0xff] %v711
    %908 = vst [vmem:[#allocation7 + $0x2c0] sm:$0xff] %v712
    %909 = vst [vmem:[#allocation7 + $0x2c8] sm:$0xff] %v713
    %910 = vst [vmem:[#allocation7 + $0x2d0] sm:$0xff] %v714
    %911 = vst [vmem:[#allocation7 + $0x2d8] sm:$0xff] %v715
    %912 = vst [vmem:[#allocation7 + $0x2e0] sm:$0xff] %v716
    %913 = vst [vmem:[#allocation7 + $0x2e8] sm:$0xff] %v717
    %914 = vst [vmem:[#allocation7 + $0x2f0] sm:$0xff] %v718
    %915 = vst [vmem:[#allocation7 + $0x2f8] sm:$0xff] %v719
    %916 = vst [vmem:[#allocation7 + $0x300] sm:$0xff] %v720
    %917 = vst [vmem:[#allocation7 + $0x308] sm:$0xff] %v721
    %918 = vst [vmem:[#allocation7 + $0x310] sm:$0xff] %v722
    %919 = vst [vmem:[#allocation7 + $0x318] sm:$0xff] %v723
    %920 = vst [vmem:[#allocation7 + $0x320] sm:$0xff] %v724
    %921 = vst [vmem:[#allocation7 + $0x328] sm:$0xff] %v725
    %922 = vst [vmem:[#allocation7 + $0x330] sm:$0xff] %v726
    %923 = vst [vmem:[#allocation7 + $0x338] sm:$0xff] %v727
    %924 = vst [vmem:[#allocation7 + $0x340] sm:$0xff] %v728
    %925 = vst [vmem:[#allocation7 + $0x348] sm:$0xff] %v729
    %926 = vst [vmem:[#allocation7 + $0x350] sm:$0xff] %v730
    %927 = vst [vmem:[#allocation7 + $0x358] sm:$0xff] %v731
    %928 = vst [vmem:[#allocation7 + $0x360] sm:$0xff] %v732
    %929 = vst [vmem:[#allocation7 + $0x368] sm:$0xff] %v733
    %930 = vst [vmem:[#allocation7 + $0x370] sm:$0xff] %v734
    %931 = vst [vmem:[#allocation7 + $0x378] sm:$0xff] %v735
    %932 = vst [vmem:[#allocation7 + $0x380] sm:$0xff] %v736
    %933 = vst [vmem:[#allocation7 + $0x388] sm:$0xff] %v737
    %934 = vst [vmem:[#allocation7 + $0x390] sm:$0xff] %v738
    %935 = vst [vmem:[#allocation7 + $0x398] sm:$0xff] %v739
    %936 = vst [vmem:[#allocation7 + $0x3a0] sm:$0xff] %v740
    %937 = vst [vmem:[#allocation7 + $0x3a8] sm:$0xff] %v741
    %938 = vst [vmem:[#allocation7 + $0x3b0] sm:$0xff] %v742
    %939 = vst [vmem:[#allocation7 + $0x3b8] sm:$0xff] %v743
    %940 = vst [vmem:[#allocation7 + $0x3c0] sm:$0xff] %v744
    %941 = vst [vmem:[#allocation7 + $0x3c8] sm:$0xff] %v745
    %942 = vst [vmem:[#allocation7 + $0x3d0] sm:$0xff] %v746
    %943 = vst [vmem:[#allocation7 + $0x3d8] sm:$0xff] %v747
    %944 = vst [vmem:[#allocation7 + $0x3e0] sm:$0xff] %v748
    %945 = vst [vmem:[#allocation7 + $0x3e8] sm:$0xff] %v749
    %946 = vst [vmem:[#allocation7 + $0x3f0] sm:$0xff] %v750
    %947 = vst [vmem:[#allocation7 + $0x3f8] sm:$0xff] %v751
    %948 = vst [vmem:[#allocation7 + $0x400] sm:$0xff] %v752
    %949 = vst [vmem:[#allocation7 + $0x408] sm:$0xff] %v753
    %950 = vst [vmem:[#allocation7 + $0x410] sm:$0xff] %v754
    %951 = vst [vmem:[#allocation7 + $0x418] sm:$0xff] %v755
    %952 = vst [vmem:[#allocation7 + $0x420] sm:$0xff] %v756
    %953 = vst [vmem:[#allocation7 + $0x428] sm:$0xff] %v757
    %954 = vst [vmem:[#allocation7 + $0x430] sm:$0xff] %v758
    %955 = vst [vmem:[#allocation7 + $0x438] sm:$0xff] %v759
    %956 = vst [vmem:[#allocation7 + $0x440] sm:$0xff] %v760
    %957 = vst [vmem:[#allocation7 + $0x448] sm:$0xff] %v761
    %958 = vst [vmem:[#allocation7 + $0x450] sm:$0xff] %v762
    %959 = vst [vmem:[#allocation7 + $0x458] sm:$0xff] %v763
    %960 = vst [vmem:[#allocation7 + $0x460] sm:$0xff] %v764
    %961 = vst [vmem:[#allocation7 + $0x468] sm:$0xff] %v765
    %962 = vst [vmem:[#allocation7 + $0x470] sm:$0xff] %v766
    %963 = vst [vmem:[#allocation7 + $0x478] sm:$0xff] %v767
    %964 = vst [vmem:[#allocation7 + $0x480] sm:$0xff] %v768
    %965 = vst [vmem:[#allocation7 + $0x488] sm:$0xff] %v769
    %966 = vst [vmem:[#allocation7 + $0x490] sm:$0xff] %v770
    %967 = vst [vmem:[#allocation7 + $0x498] sm:$0xff] %v771
    %968 = vst [vmem:[#allocation7 + $0x4a0] sm:$0xff] %v772
    %969 = vst [vmem:[#allocation7 + $0x4a8] sm:$0xff] %v773
    %970 = vst [vmem:[#allocation7 + $0x4b0] sm:$0xff] %v774
    %971 = vst [vmem:[#allocation7 + $0x4b8] sm:$0xff] %v775
    %972 = vst [vmem:[#allocation7 + $0x4c0] sm:$0xff] %v776
    %973 = vst [vmem:[#allocation7 + $0x4c8] sm:$0xff] %v777
    %974 = vst [vmem:[#allocation7 + $0x4d0] sm:$0xff] %v778
    %975 = vst [vmem:[#allocation7 + $0x4d8] sm:$0xff] %v779
    %976 = vst [vmem:[#allocation7 + $0x4e0] sm:$0xff] %v780
    %977 = vst [vmem:[#allocation7 + $0x4e8] sm:$0xff] %v781
    %978 = vst [vmem:[#allocation7 + $0x4f0] sm:$0xff] %v782
    %979 = vst [vmem:[#allocation7 + $0x4f8] sm:$0xff] %v783
    %980 = vst [vmem:[#allocation7 + $0x500] sm:$0xff] %v784
    %981 = vst [vmem:[#allocation7 + $0x508] sm:$0xff] %v785
    %982 = vst [vmem:[#allocation7 + $0x510] sm:$0xff] %v786
    %983 = vst [vmem:[#allocation7 + $0x518] sm:$0xff] %v787
    %984 = vst [vmem:[#allocation7 + $0x520] sm:$0xff] %v788
    %985 = vst [vmem:[#allocation7 + $0x528] sm:$0xff] %v789
    %986 = vst [vmem:[#allocation7 + $0x530] sm:$0xff] %v790
    %987 = vst [vmem:[#allocation7 + $0x538] sm:$0xff] %v791
    %988 = vst [vmem:[#allocation7 + $0x540] sm:$0xff] %v792
    %989 = vst [vmem:[#allocation7 + $0x548] sm:$0xff] %v793
    %990 = vst [vmem:[#allocation7 + $0x550] sm:$0xff] %v794
    %991 = vst [vmem:[#allocation7 + $0x558] sm:$0xff] %v795
    %992 = vst [vmem:[#allocation7 + $0x560] sm:$0xff] %v796
    %993 = vst [vmem:[#allocation7 + $0x568] sm:$0xff] %v797
    %994 = vst [vmem:[#allocation7 + $0x570] sm:$0xff] %v798
    %995 = vst [vmem:[#allocation7 + $0x578] sm:$0xff] %v799
    %996 = vst [vmem:[#allocation7 + $0x580] sm:$0xff] %v800
    %997 = vst [vmem:[#allocation7 + $0x588] sm:$0xff] %v801
    %998 = vst [vmem:[#allocation7 + $0x590] sm:$0xff] %v802
    %999 = vst [vmem:[#allocation7 + $0x598] sm:$0xff] %v803
    %1000 = vst [vmem:[#allocation7 + $0x5a0] sm:$0xff] %v804
    %1001 = vst [vmem:[#allocation7 + $0x5a8] sm:$0xff] %v805
    %1002 = vst [vmem:[#allocation7 + $0x5b0] sm:$0xff] %v806
    %1003 = vst [vmem:[#allocation7 + $0x5b8] sm:$0xff] %v807
    %1004 = vst [vmem:[#allocation7 + $0x5c0] sm:$0xff] %v808
    %1005 = vst [vmem:[#allocation7 + $0x5c8] sm:$0xff] %v809
    %1006 = vst [vmem:[#allocation7 + $0x5d0] sm:$0xff] %v810
    %1007 = vst [vmem:[#allocation7 + $0x5d8] sm:$0xff] %v811
    %1008 = vst [vmem:[#allocation7 + $0x5e0] sm:$0xff] %v812
    %1009 = vst [vmem:[#allocation7 + $0x5e8] sm:$0xff] %v813
    %1010 = vst [vmem:[#allocation7 + $0x5f0] sm:$0xff] %v814
    %1011 = vst [vmem:[#allocation7 + $0x5f8] sm:$0xff] %v815
    %1012 = vst [vmem:[#allocation7 + $0x600] sm:$0xff] %v816
    %1013 = vst [vmem:[#allocation7 + $0x608] sm:$0xff] %v817
    %1014 = vst [vmem:[#allocation7 + $0x610] sm:$0xff] %v818
    %1015 = vst [vmem:[#allocation7 + $0x618] sm:$0xff] %v819
    // Predicated region
    $region18: #{tpu_custom_call.1} parent=1 // pred_check
      _
    $region19: #{tpu_custom_call.1} parent=1 // pred_check_branch
      %1017 = sbr.rel (0) target = $region21
    $region20: #{tpu_custom_call.1} parent=1 // pred_region
      %s1019 = ssub.s32 25088, 25088
      %1020 = vsyncadd [#allocation4], %s1019
      %s1022 = sshll.u32 [#allocation7], 4
      %s1023 = int_to_ptr.vmem [resolvable:$true] %s1022
      %1025 = dma.vmem_to_hbm [thread:$0]  %s1023, 25088, %s2, [#allocation4]
    $region21: #{tpu_custom_call.1} parent=1 // pred_fallthru
      _
    // Predicated region
    $region22: #{tpu_custom_call.1} parent=1 // pred_check
      _
    $region23: #{tpu_custom_call.1} parent=1 // pred_check_branch
      %1027 = sbr.rel (0) target = $region25
    $region24: #{tpu_custom_call.1} parent=1 // pred_region
      %1028 = dma.done [#allocation4], 25088
    $region25: #{tpu_custom_call.1} parent=1 // pred_fallthru
      _
    %1029 = vsyncpa [#allocation3], 1
    %1030 = vsyncpa [#allocation6], 1
    %1031 = vsyncpa [#allocation4], 1

</llo_original>
